<compile_context>
chip_gen: v6e
topology: v6e:2x2x1
jax: 0.10.0
libtpu: 0.0.40
codegen_flags: <defaults>
</compile_context>

<pallas_src>
import jax
import jax.numpy as jnp
from jax.experimental import pallas as pl
from jax.experimental.pallas import tpu as pltpu


def _round_up(x, m):
    return ((x + m - 1) // m) * m


def _round_down(x, m):
    return (x // m) * m


def _cdiv(a, b):
    return -(-a // b)


def _vmem_capacity_bytes():
    """Physical VMEM per TensorCore; conservative fallback if the query fails."""
    try:
        cap = getattr(pltpu.get_tpu_info(), "vmem_capacity_bytes", None)
        if cap:
            return int(cap)
    except Exception:
        pass
    # 64 MiB == v7x per-TC capacity (smallest of the supported generations), so
    # budgets derived from it are safe on every chip.
    return 64 * 1024 * 1024


def _make_lr_kernel(F, TB, TK, ragged):
    tail = F % TK  # first invalid column inside the last K block (when ragged)

    def kernel(x_ref, w_ref, b_ref, o_ref):
        # x_ref: [TB, TK]  compute dtype (bf16 stays bf16 -> half HBM traffic)
        # w_ref: [1, TK]   lane-dense weight row (compute dtype)
        # b_ref: [1, 1]    f32 scalar in SMEM
        # o_ref: [TB, 1]   f32; resident across the K axis -> used as accumulator
        k = pl.program_id(1)
        k_last = pl.num_programs(1) - 1

        @pl.when(k == 0)
        def _init():
            o_ref[...] = jnp.zeros_like(o_ref)

        if ragged:
            # The last K block extends past F: its DMA only fills the valid
            # columns, the rest is stale VMEM (arbitrary bits, possibly NaN/Inf).
            # Zero that tail in place; the weight row is host-zero-padded, so
            # every tail product is exactly 0.0.
            @pl.when(k == k_last)
            def _zero_tail():
                x_ref[:, tail:] = jnp.zeros((TB, TK - tail), x_ref.dtype)

        # (TB, TK) · (1, TK) contracted over the last dims -> (TB, 1): skinny MXU
        # matmul with f32 accumulation directly into the resident output block.
        o_ref[...] += jax.lax.dot_general(
            x_ref[...], w_ref[...],
            dimension_numbers=(((1,), (1,)), ((), ())),
            preferred_element_type=jnp.float32)

        @pl.when(k == k_last)
        def _finalize():
            o_ref[...] = jax.nn.sigmoid(o_ref[...] + b_ref[0, 0])

    return kernel


def lr_forward(x, weight, bias):
    """sigmoid(flatten(x) @ weight.T + bias)  ==  LRmodule.forward(x).

    x:      [B, ...]  (flattened to [B, F], F = prod(rest) = input_size)
    weight: [1, F]    (nn.Linear(F, 1).weight)
    bias:   [1]       (nn.Linear(F, 1).bias)
    returns [B, 1] float32
    """
    B = x.shape[0]
    x2d = x.reshape(B, -1)                         # glue: torch .view(B, -1)
    F = x2d.shape[1]

    # Keep bf16 activations in bf16 (halves HBM traffic of the dominant read);
    # anything else computes in f32.  Accumulation is always f32.
    # NOTE: with bf16 activations the weight is also fed to the MXU in bf16
    # (~1e-3 relative quantization); exact for f32 inputs.
    compute_dtype = x2d.dtype if x2d.dtype in (jnp.bfloat16, jnp.float32) else jnp.float32
    x2d = x2d.astype(compute_dtype)
    w_row = weight.reshape(1, F).astype(compute_dtype)   # lane-dense row, contiguous DMA
    b = bias.astype(jnp.float32).reshape(1, 1)

    itemsize = jnp.dtype(compute_dtype).itemsize

    # ---- per-generation VMEM budget (v5e/v6e: 128 MiB, v7x: 64 MiB per TC) ----
    vmem_cap = _vmem_capacity_bytes()
    stream_budget = max(4 << 20, (2 * vmem_cap) // 5)     # double-buffered x + w blocks
    vmem_limit = int(min(vmem_cap - (8 << 20), (3 * vmem_cap) // 4))

    # ---- batch tile: >=2 tiles whenever possible so the "parallel" axis can be
    #      sharded across both TensorCores on v7x and pipelined across batch. ----
    TB_CAP = 1024
    B8 = _round_up(B, 8)
    if B8 >= 16:
        TB = min(TB_CAP, _round_up(_cdiv(B, 2), 8))
    else:
        TB = B8

    # ---- feature tile sized from the VMEM budget.  The (1, TK) weight block is
    #      sublane-padded to 8 rows in VMEM; both operands are double-buffered. ----
    per_tk_bytes = 2 * (TB + 8) * itemsize
    TK_budget = max(128, _round_down(stream_budget // per_tk_bytes, 128))
    Fp = _round_up(F, 128)
    if TK_budget >= Fp:
        TK = Fp
    else:
        # Prefer a TK that divides Fp (avoids a tiny ragged last block) as long
        # as it doesn't shrink the tile by more than ~25%.
        g, cap = Fp // 128, TK_budget // 128
        tk_div = next((128 * d for d in range(min(g, cap), 0, -1) if g % d == 0), 128)
        TK = tk_div if tk_div >= (3 * TK_budget) // 4 else TK_budget

    grid_b = _cdiv(B, TB)
    grid_k = _cdiv(F, TK)
    Bp = grid_b * TB
    ragged = (F % TK) != 0

    # Pad only the tiny weight row so its blocks never read out of bounds and its
    # padded columns are exactly zero (x itself is NOT padded on the host).
    Wp = grid_k * TK
    if Wp != F:
        w_row = jnp.pad(w_row, ((0, 0), (0, Wp - F)))

    kernel = _make_lr_kernel(F, TB, TK, ragged)

    out = pl.pallas_call(
        kernel,
        out_shape=jax.ShapeDtypeStruct((Bp, 1), jnp.float32),
        grid_spec=pltpu.PrefetchScalarGridSpec(
            num_scalar_prefetch=0,
            grid=(grid_b, grid_k),
            in_specs=[
                # x tile: streamed over batch (parallel) and features (reduction)
                pl.BlockSpec((TB, TK), lambda i, k: (i, k)),
                # weight row tile: depends only on the reduction index
                pl.BlockSpec((1, TK), lambda i, k: (0, k)),
                # bias: single scalar in SMEM (no VMEM tile / DMA)
                pl.BlockSpec(memory_space=pltpu.MemorySpace.SMEM),
            ],
            out_specs=pl.BlockSpec((TB, 1), lambda i, k: (i, 0)),
        ),
        compiler_params=pltpu.CompilerParams(
            # batch axis -> megacore-parallel (both v7x TCs stream HBM);
            # feature axis -> reduction into the resident output block.
            dimension_semantics=("parallel", "arbitrary"),
            vmem_limit_bytes=vmem_limit,
        ),
        cost_estimate=pl.CostEstimate(
            flops=2 * B * F,
            transcendentals=B,
            bytes_accessed=B * F * itemsize + grid_b * Wp * itemsize + Bp * 4 + 4,
        ),
    )(x2d, w_row, b)

    return out[:B]


if __name__ == "__main__":
    # Small shapes consistent with the module: x = [batch, C, H, W],
    # input_size = C*H*W.
    B, C, H, W = 2, 4, 16, 16
    input_size = C * H * W  # 1024

    key = jax.random.PRNGKey(0)
    kx, kw, kb = jax.random.split(key, 3)

    x = jax.random.normal(kx, (B, C, H, W), dtype=jnp.float32)

    # Deterministic parameter init (mirrors nn.Linear's U(-1/sqrt(in), 1/sqrt(in)))
    bound = 1.0 / (input_size ** 0.5)
    weight = jax.random.uniform(kw, (1, input_size), jnp.float32, -bound, bound)
    bias = jax.random.uniform(kb, (1,), jnp.float32, -bound, bound)

    out = lr_forward(x, weight, bias)
    out = jax.block_until_ready(out)

    # Reference check in plain JAX
    ref = jax.nn.sigmoid(x.reshape(B, -1) @ weight.T + bias)
    assert out.shape == (B, 1), out.shape
    assert jnp.allclose(out, ref, atol=1e-5, rtol=1e-5)

    print("KERNEL_OK")
</pallas_src>

<mosaic_0001>
module attributes {stable_mosaic.version = 11 : i64} {
  func.func @kernel(%arg0: i32, %arg1: i32, %arg2: memref<8x1024xf32, #tpu.memory_space<vmem>>, %arg3: memref<1x1024xf32, #tpu.memory_space<vmem>>, %arg4: memref<1x1xf32, #tpu.memory_space<smem>>, %arg5: memref<8x1xf32, #tpu.memory_space<vmem>>) attributes {dimension_semantics = [#tpu.dimension_semantics<parallel>, #tpu.dimension_semantics<arbitrary>], iteration_bounds = array<i64: 1, 1>, scalar_prefetch = 0 : i64, scratch_operands = 0 : i64, tpu.core_type = #tpu.core_type<tc>, window_params = [{transform_indices = @transform_0, window_bounds = array<i64: 8, 1024>}, {transform_indices = @transform_1, window_bounds = array<i64: 1, 1024>}, {transform_indices = @transform_2, window_bounds = array<i64: 1, 1>}, {transform_indices = @transform_3, window_bounds = array<i64: 8, 1>}]} {
    %c0_i32 = arith.constant 0 : i32
    %0 = arith.cmpi eq, %arg1, %c0_i32 : i32
    %1 = arith.extui %0 : i1 to i32
    %c0_i32_0 = arith.constant 0 : i32
    %2 = arith.cmpi ne, %1, %c0_i32_0 : i32
    scf.if %2 {
      %cst_10 = arith.constant 0.000000e+00 : f32
      %12 = vector.broadcast %cst_10 : f32 to vector<8x1xf32>
      %c0_11 = arith.constant 0 : index
      %c0_12 = arith.constant 0 : index
      %13 = vector.load %arg5[%c0_11, %c0_12] : memref<8x1xf32, #tpu.memory_space<vmem>>, vector<8x1xf32>
      tpu.vector_store %arg5[%c0_11, %c0_12], %12 {strides = array<i32>} : memref<8x1xf32, #tpu.memory_space<vmem>>, vector<8x1xf32>,
    } else {
    }
    %c0 = arith.constant 0 : index
    %c0_1 = arith.constant 0 : index
    %3 = vector.load %arg5[%c0, %c0_1] : memref<8x1xf32, #tpu.memory_space<vmem>>, vector<8x1xf32>
    %c0_2 = arith.constant 0 : index
    %c0_3 = arith.constant 0 : index
    %4 = vector.load %arg2[%c0_2, %c0_3] : memref<8x1024xf32, #tpu.memory_space<vmem>>, vector<8x1024xf32>
    %c0_4 = arith.constant 0 : index
    %c0_5 = arith.constant 0 : index
    %5 = vector.load %arg3[%c0_4, %c0_5] : memref<1x1024xf32, #tpu.memory_space<vmem>>, vector<1x1024xf32>
    %cst = arith.constant dense<0.000000e+00> : vector<8x1xf32>
    %6 = tpu.matmul %4, %5, %cst {dimension_numbers = #tpu.dot_dimension_numbers<[1], [1], [0], [0], [0, 0, 1, 0], [], []>} : vector<8x1024xf32>, vector<1x1024xf32>, vector<8x1xf32> -> vector<8x1xf32>
    %7 = arith.addf %3, %6 : vector<8x1xf32>
    %c0_6 = arith.constant 0 : index
    %c0_7 = arith.constant 0 : index
    %8 = vector.load %arg5[%c0_6, %c0_7] : memref<8x1xf32, #tpu.memory_space<vmem>>, vector<8x1xf32>
    tpu.vector_store %arg5[%c0_6, %c0_7], %7 {strides = array<i32>} : memref<8x1xf32, #tpu.memory_space<vmem>>, vector<8x1xf32>,
    %c0_i32_8 = arith.constant 0 : i32
    %9 = arith.cmpi eq, %arg1, %c0_i32_8 : i32
    %10 = arith.extui %9 : i1 to i32
    %c0_i32_9 = arith.constant 0 : i32
    %11 = arith.cmpi ne, %10, %c0_i32_9 : i32
    scf.if %11 {
      %c0_10 = arith.constant 0 : index
      %c0_11 = arith.constant 0 : index
      %12 = vector.load %arg5[%c0_10, %c0_11] : memref<8x1xf32, #tpu.memory_space<vmem>>, vector<8x1xf32>
      %c0_12 = arith.constant 0 : index
      %c0_13 = arith.constant 0 : index
      %13 = memref.load %arg4[%c0_12, %c0_13] : memref<1x1xf32, #tpu.memory_space<smem>>
      %14 = vector.broadcast %13 : f32 to vector<8x1xf32>
      %15 = arith.addf %12, %14 : vector<8x1xf32>
      %16 = arith.negf %15 : vector<8x1xf32>
      %17 = math.exp %16 : vector<8x1xf32>
      %cst_14 = arith.constant 1.000000e+00 : f32
      %18 = vector.broadcast %cst_14 : f32 to vector<8x1xf32>
      %19 = arith.addf %18, %17 : vector<8x1xf32>
      %20 = arith.divf %18, %19 : vector<8x1xf32>
      %c0_15 = arith.constant 0 : index
      %c0_16 = arith.constant 0 : index
      %21 = vector.load %arg5[%c0_15, %c0_16] : memref<8x1xf32, #tpu.memory_space<vmem>>, vector<8x1xf32>
      tpu.vector_store %arg5[%c0_15, %c0_16], %20 {strides = array<i32>} : memref<8x1xf32, #tpu.memory_space<vmem>>, vector<8x1xf32>,
    } else {
    }
    return
  }
  func.func @transform_0(%arg0: i32, %arg1: i32) -> (i32, i32) {
    %c0_i32 = arith.constant 0 : i32
    return %arg0, %arg1 : i32, i32
  }
  func.func @transform_1(%arg0: i32, %arg1: i32) -> (i32, i32) {
    %c0_i32 = arith.constant 0 : i32
    %c0_i32_0 = arith.constant 0 : i32
    return %c0_i32, %arg1 : i32, i32
  }
  func.func @transform_2(%arg0: i32, %arg1: i32) -> (i32, i32) {
    %c0_i32 = arith.constant 0 : i32
    %c0_i32_0 = arith.constant 0 : i32
    %c0_i32_1 = arith.constant 0 : i32
    return %c0_i32, %c0_i32_0 : i32, i32
  }
  func.func @transform_3(%arg0: i32, %arg1: i32) -> (i32, i32) {
    %c0_i32 = arith.constant 0 : i32
    %c0_i32_0 = arith.constant 0 : i32
    return %arg0, %c0_i32 : i32, i32
  }
}

</mosaic_0001>

<llo_original>
// kernel: tpu_custom_call.1
$region0: #{tpu_custom_call.1}
  #allocation0 [shape = 'u32[]', space=smem, size = 0x4, offset = 0x4, fixed_abs, tag = 'smem constant byte address 0x4 - core index']
  #allocation1 [shape = 'u32[144,128]{1,0:T(1,128)}', space=vmem, size = 0x12000, scoped, tag = 'internal scratch']
  #allocation2 [shape = 'f32[1,1]{1,0:T(1,128)S(6)}', space=smem, size = 0x200, scoped, tag = 'scoped memory for tpu_custom_call.1']
  %s0 = inlined_call_operand.hbm [shape: f32[2,1024], index: 0, kind: input, shape index: {}]
  %s1 = inlined_call_operand.hbm [shape: f32[1,1024], index: 1, kind: input, shape index: {}]
  %s2 = inlined_call_operand.<no memory space> [shape: f32[1,1], index: 2, kind: input, shape index: {}]
  %s3 = inlined_call_operand.vmem [shape: f32[8,1], index: 3, kind: output, shape index: {}]
  %s4 = sld [smem:[#allocation0]]
  $region38: #{tpu_custom_call.1} parent=0
    _
  %s6 = ssub.s32 1, %s4
  %s7 = scalar_select 0, %s6, %s4
  %8 = sst [smem:[#allocation2]] %s2
  $region1: #{tpu_custom_call.1} parent=0
    #allocation3 [shape = 'u8[32768]{0}', space=vmem, size = 0x8000, scoped, tag = 'input window, operand 0, single buffered']
    #allocation4 [shape = 's32[1]{0}', space=sflag, size = 0x4, scoped, tag = 'scoped memory for tpu_custom_call.1']
    #allocation5 [shape = 'u8[4096]{0}', space=vmem, size = 0x1000, scoped, tag = 'input window, operand 1, single buffered']
    #allocation6 [shape = 's32[1]{0}', space=sflag, size = 0x4, scoped, tag = 'scoped memory for tpu_custom_call.1']
    %9 = vsyncpa [#allocation4], 0
    %10 = vsyncpa [#allocation6], 0
    // Predicated region
    $region2: #{tpu_custom_call.1} parent=1 // pred_check
      _
    $region3: #{tpu_custom_call.1} parent=1 // pred_check_branch
      %12 = sbr.rel (0) target = $region5
    $region4: #{tpu_custom_call.1} parent=1 // pred_region
      %s14 = ssub.s32 1024, 256
      %15 = vsyncadd [#allocation4], %s14
      %s16 = sshll.u32 [#allocation3], 4
      %s17 = int_to_ptr.vmem [resolvable:$true] %s16
      %22 = dma.hbm_to_vmem [thread:$0]  %s0, 256, %s17, [#allocation4], 256, 256, 16
    $region5: #{tpu_custom_call.1} parent=1 // pred_fallthru
      _
    // Predicated region
    $region6: #{tpu_custom_call.1} parent=1 // pred_check
      _
    $region7: #{tpu_custom_call.1} parent=1 // pred_check_branch
      %24 = sbr.rel (0) target = $region9
    $region8: #{tpu_custom_call.1} parent=1 // pred_region
      %s26 = ssub.s32 128, 128
      %27 = vsyncadd [#allocation6], %s26
      %s29 = sshll.u32 [#allocation5], 4
      %s30 = int_to_ptr.vmem [resolvable:$true] %s29
      %32 = dma.hbm_to_vmem [thread:$0]  %s1, 128, %s30, [#allocation6]
    $region9: #{tpu_custom_call.1} parent=1 // pred_fallthru
      _
    // Predicated region
    $region10: #{tpu_custom_call.1} parent=1 // pred_check
      _
    $region11: #{tpu_custom_call.1} parent=1 // pred_check_branch
      %34 = sbr.rel (0) target = $region13
    $region12: #{tpu_custom_call.1} parent=1 // pred_region
      _
    $region13: #{tpu_custom_call.1} parent=1 // pred_fallthru
      _
    // Predicated region
    $region14: #{tpu_custom_call.1} parent=1 // pred_check
      _
    $region15: #{tpu_custom_call.1} parent=1 // pred_check_branch
      %36 = sbr.rel (0) target = $region17
    $region16: #{tpu_custom_call.1} parent=1 // pred_region
      %37 = dma.done [#allocation4], 1024
    $region17: #{tpu_custom_call.1} parent=1 // pred_fallthru
      _
    // Predicated region
    $region18: #{tpu_custom_call.1} parent=1 // pred_check
      _
    $region19: #{tpu_custom_call.1} parent=1 // pred_check_branch
      %39 = sbr.rel (0) target = $region21
    $region20: #{tpu_custom_call.1} parent=1 // pred_region
      %40 = dma.done [#allocation6], 128
    $region21: #{tpu_custom_call.1} parent=1 // pred_fallthru
      _
    %p41 = scmp.eq.s32.totalorder 0, 0
    // Predicated region
    $region22: #{tpu_custom_call.1} parent=1 // pred_check
      %p42 = pneg %p41
    $region23: #{tpu_custom_call.1} parent=1 // pred_check_branch
      %44 = sbr.rel (%p42) target = $region25
    $region24: #{tpu_custom_call.1} parent=1 // pred_region
      %vm45 = vcmask 7168
      %46 = vst.msk [vmem:[%s3] sm:$0xff] %vm45, 0.0
    $region25: #{tpu_custom_call.1} parent=1 // pred_fallthru
      _
    %v47 = vld [vmem:[%s3] sm:$0xff]
    %v48 = vld [vmem:[#allocation3] sm:$0xff]
    %v49 = vld [vmem:[#allocation3 + $0x8] sm:$0xff]
    %v50 = vld [vmem:[#allocation3 + $0x10] sm:$0xff]
    %v51 = vld [vmem:[#allocation3 + $0x18] sm:$0xff]
    %v52 = vld [vmem:[#allocation3 + $0x20] sm:$0xff]
    %v53 = vld [vmem:[#allocation3 + $0x28] sm:$0xff]
    %v54 = vld [vmem:[#allocation3 + $0x30] sm:$0xff]
    %v55 = vld [vmem:[#allocation3 + $0x38] sm:$0xff]
    %v56 = vld [vmem:[#allocation5] sm:$0xff]
    %v58 = vlaneseq
    %v59 = vshrl.u32 %v58, 7
    %v60 = vsub.s32 0, %v59
    %v61 = vrot.slane %v56, %v60
    %v62 = vlaneseq
    %v63 = vshrl.u32 %v62, 7
    %v64 = vsub.s32 1, %v63
    %v65 = vrot.slane %v56, %v64
    %v66 = vlaneseq
    %v67 = vshrl.u32 %v66, 7
    %v68 = vsub.s32 2, %v67
    %v69 = vrot.slane %v56, %v68
    %v70 = vlaneseq
    %v71 = vshrl.u32 %v70, 7
    %v72 = vsub.s32 3, %v71
    %v73 = vrot.slane %v56, %v72
    %v74 = vlaneseq
    %v75 = vshrl.u32 %v74, 7
    %v76 = vsub.s32 4, %v75
    %v77 = vrot.slane %v56, %v76
    %v78 = vlaneseq
    %v79 = vshrl.u32 %v78, 7
    %v80 = vsub.s32 5, %v79
    %v81 = vrot.slane %v56, %v80
    %v82 = vlaneseq
    %v83 = vshrl.u32 %v82, 7
    %v84 = vsub.s32 6, %v83
    %v85 = vrot.slane %v56, %v84
    %v86 = vlaneseq
    %v87 = vshrl.u32 %v86, 7
    %v88 = vsub.s32 7, %v87
    %v89 = vrot.slane %v56, %v88
    %v90 = vcombine.low %v61, %v65
    %v91 = vcombine.high %v61, %v65
    %v92 = vcombine.low %v69, %v73
    %v93 = vcombine.high %v69, %v73
    %v95 = vunpack.c.l.s4 1983009808
    %v96 = vunpack.c.0.s8 %v95
    %v97 = vlaneseq
    %v98 = vshrl.u32 %v97, 7
    %v99 = vsub.s32 %v96, %v98
    %v100 = vrot.slane %v90, %v99
    %v102 = vunpack.c.l.s4 1983009808
    %v103 = vunpack.c.0.s8 %v102
    %v104 = vlaneseq
    %v105 = vshrl.u32 %v104, 7
    %v106 = vsub.s32 %v103, %v105
    %v107 = vrot.slane %v91, %v106
    %v109 = vunpack.c.l.s4 1983009808
    %v110 = vunpack.c.0.s8 %v109
    %v111 = vlaneseq
    %v112 = vshrl.u32 %v111, 7
    %v113 = vsub.s32 %v110, %v112
    %v114 = vrot.slane %v92, %v113
    %v116 = vunpack.c.l.s4 1983009808
    %v117 = vunpack.c.0.s8 %v116
    %v118 = vlaneseq
    %v119 = vshrl.u32 %v118, 7
    %v120 = vsub.s32 %v117, %v119
    %v121 = vrot.slane %v93, %v120
    %v122 = vcombine.low %v100, %v114
    %v123 = vcombine.high %v100, %v114
    %v124 = vcombine.low %v107, %v121
    %v125 = vcombine.high %v107, %v121
    %v126 = vcombine.low %v77, %v81
    %v127 = vcombine.high %v77, %v81
    %v128 = vcombine.low %v85, %v89
    %v129 = vcombine.high %v85, %v89
    %v131 = vunpack.c.l.s4 1983009808
    %v132 = vunpack.c.0.s8 %v131
    %v133 = vlaneseq
    %v134 = vshrl.u32 %v133, 7
    %v135 = vsub.s32 %v132, %v134
    %v136 = vrot.slane %v126, %v135
    %v138 = vunpack.c.l.s4 1983009808
    %v139 = vunpack.c.0.s8 %v138
    %v140 = vlaneseq
    %v141 = vshrl.u32 %v140, 7
    %v142 = vsub.s32 %v139, %v141
    %v143 = vrot.slane %v127, %v142
    %v145 = vunpack.c.l.s4 1983009808
    %v146 = vunpack.c.0.s8 %v145
    %v147 = vlaneseq
    %v148 = vshrl.u32 %v147, 7
    %v149 = vsub.s32 %v146, %v148
    %v150 = vrot.slane %v128, %v149
    %v152 = vunpack.c.l.s4 1983009808
    %v153 = vunpack.c.0.s8 %v152
    %v154 = vlaneseq
    %v155 = vshrl.u32 %v154, 7
    %v156 = vsub.s32 %v153, %v155
    %v157 = vrot.slane %v129, %v156
    %v158 = vcombine.low %v136, %v150
    %v159 = vcombine.high %v136, %v150
    %v160 = vcombine.low %v143, %v157
    %v161 = vcombine.high %v143, %v157
    %v170 = vmul.f32 %v48, %v122
    %v171 = vmul.f32 %v49, %v158
    %v172 = vmul.f32 %v50, %v123
    %v173 = vmul.f32 %v51, %v159
    %v174 = vmul.f32 %v52, %v124
    %v175 = vmul.f32 %v53, %v160
    %v176 = vmul.f32 %v54, %v125
    %v177 = vmul.f32 %v55, %v161
    %v186 = vcombine.low %v170, %v172
    %v187 = vcombine.high %v170, %v172
    %v188 = vcombine.low %v174, %v176
    %v189 = vcombine.high %v174, %v176
    %v191 = vunpack.c.l.s4 1983009808
    %v192 = vunpack.c.0.s8 %v191
    %v193 = vlaneseq
    %v194 = vshrl.u32 %v193, 7
    %v195 = vsub.s32 %v192, %v194
    %v196 = vrot.slane %v186, %v195
    %v198 = vunpack.c.l.s4 1983009808
    %v199 = vunpack.c.0.s8 %v198
    %v200 = vlaneseq
    %v201 = vshrl.u32 %v200, 7
    %v202 = vsub.s32 %v199, %v201
    %v203 = vrot.slane %v187, %v202
    %v205 = vunpack.c.l.s4 1983009808
    %v206 = vunpack.c.0.s8 %v205
    %v207 = vlaneseq
    %v208 = vshrl.u32 %v207, 7
    %v209 = vsub.s32 %v206, %v208
    %v210 = vrot.slane %v188, %v209
    %v212 = vunpack.c.l.s4 1983009808
    %v213 = vunpack.c.0.s8 %v212
    %v214 = vlaneseq
    %v215 = vshrl.u32 %v214, 7
    %v216 = vsub.s32 %v213, %v215
    %v217 = vrot.slane %v189, %v216
    %v218 = vcombine.low %v196, %v210
    %v219 = vcombine.high %v196, %v210
    %v220 = vcombine.low %v203, %v217
    %v221 = vcombine.high %v203, %v217
    %v222 = vcombine.low %v171, %v173
    %v223 = vcombine.high %v171, %v173
    %v224 = vcombine.low %v175, %v177
    %v225 = vcombine.high %v175, %v177
    %v227 = vunpack.c.l.s4 1983009808
    %v228 = vunpack.c.0.s8 %v227
    %v229 = vlaneseq
    %v230 = vshrl.u32 %v229, 7
    %v231 = vsub.s32 %v228, %v230
    %v232 = vrot.slane %v222, %v231
    %v234 = vunpack.c.l.s4 1983009808
    %v235 = vunpack.c.0.s8 %v234
    %v236 = vlaneseq
    %v237 = vshrl.u32 %v236, 7
    %v238 = vsub.s32 %v235, %v237
    %v239 = vrot.slane %v223, %v238
    %v241 = vunpack.c.l.s4 1983009808
    %v242 = vunpack.c.0.s8 %v241
    %v243 = vlaneseq
    %v244 = vshrl.u32 %v243, 7
    %v245 = vsub.s32 %v242, %v244
    %v246 = vrot.slane %v224, %v245
    %v248 = vunpack.c.l.s4 1983009808
    %v249 = vunpack.c.0.s8 %v248
    %v250 = vlaneseq
    %v251 = vshrl.u32 %v250, 7
    %v252 = vsub.s32 %v249, %v251
    %v253 = vrot.slane %v225, %v252
    %v254 = vcombine.low %v232, %v246
    %v255 = vcombine.high %v232, %v246
    %v256 = vcombine.low %v239, %v253
    %v257 = vcombine.high %v239, %v253
    %v266 = vadd.f32 %v218, %v219
    %v267 = vadd.f32 %v266, %v220
    %v268 = vadd.f32 %v267, %v221
    %v269 = vadd.f32 %v268, %v254
    %v270 = vadd.f32 %v269, %v255
    %v271 = vadd.f32 %v270, %v256
    %v272 = vadd.f32 %v271, %v257
    %273 = vadd.xlane.f32.xlu0 %v272
    %v274 = vpop.xlane.xlu0 %273
    %v275 = vadd.f32 %v47, %v274
    %vm276 = vcmask 7168
    %277 = vst.msk [vmem:[%s3] sm:$0xff] %vm276, %v275
    // Predicated region
    $region26: #{tpu_custom_call.1} parent=1 // pred_check
      %p278 = pneg %p41
    $region27: #{tpu_custom_call.1} parent=1 // pred_check_branch
      %280 = sbr.rel (%p278) target = $region29
    $region28: #{tpu_custom_call.1} parent=1 // pred_region
      %v281 = vld [vmem:[%s3] sm:$0xff]
      %s282 = sld [smem:[#allocation2]]
      %v283 = vstv %s282
      %v284 = vadd.f32 %v281, %v283
      %v285 = vxor.u32 %v284, 2147483648
      %v286 = vmul.f32 %v285, 1.442695
      %v287 = vpow.pop %v286
      %v288 = vadd.f32 %v287, 1.0
      %v289 = vrcp.pop %v288
      %v290 = vmul.f32 1.0, %v289
      %291 = vst.msk [vmem:[%s3] sm:$0xff] %vm276, %v290
    $region29: #{tpu_custom_call.1} parent=1 // pred_fallthru
      _
    // Predicated region
    $region30: #{tpu_custom_call.1} parent=1 // pred_check
      _
    $region31: #{tpu_custom_call.1} parent=1 // pred_check_branch
      %293 = sbr.rel (0) target = $region33
    $region32: #{tpu_custom_call.1} parent=1 // pred_region
      _
    $region33: #{tpu_custom_call.1} parent=1 // pred_fallthru
      _
    // Predicated region
    $region34: #{tpu_custom_call.1} parent=1 // pred_check
      _
    $region35: #{tpu_custom_call.1} parent=1 // pred_check_branch
      %295 = sbr.rel (0) target = $region37
    $region36: #{tpu_custom_call.1} parent=1 // pred_region
      _
    $region37: #{tpu_custom_call.1} parent=1 // pred_fallthru
      _
    %296 = vsyncpa [#allocation4], 1
    %297 = vsyncpa [#allocation6], 1

</llo_original>
